<compile_context>
chip_gen: v7x
topology: tpu7x:2x2x1
jax: 0.10.0
libtpu: 0.0.40
codegen_flags: <defaults>
</compile_context>

<pallas_src>
import jax
import jax.numpy as jnp
from jax.experimental import pallas as pl
from jax.experimental.pallas import tpu as pltpu

_LANE = 128
_SUBLANE = 8


def _round_up(n: int, m: int) -> int:
    return ((n + m - 1) // m) * m


def _vmem_capacity_bytes() -> int:
    # Conservative fallback = 64 MiB (v7x per-TC VMEM, the smallest).
    try:
        return int(pltpu.get_tpu_info().vmem_capacity_bytes)
    except Exception:  # older jax / non-TPU tracing
        return 64 << 20


def _mlp_kernel(x_ref, w1_ref, w2_ref, w3_ref, o_ref):
    # Fused forward: matmul -> relu -> matmul -> relu -> matmul (MXU, f32 acc).
    x = x_ref[...]
    h1 = jnp.maximum(
        jnp.dot(x, w1_ref[...], preferred_element_type=jnp.float32), 0.0)
    h2 = jnp.maximum(
        jnp.dot(h1, w2_ref[...], preferred_element_type=jnp.float32), 0.0)
    o_ref[...] = jnp.dot(
        h2, w3_ref[...], preferred_element_type=jnp.float32).astype(o_ref.dtype)


def prepare_weights(w1, w2, w3):
    """Transpose PyTorch (out,in) -> (in,out) and zero-pad hidden dims to
    sublane multiples. Call ONCE per weight set (hoisted out of the forward
    hot path); zero rows/cols contribute exactly 0, so results are exact."""
    f1, fi = w1.shape
    f2, _ = w2.shape
    fo, _ = w3.shape
    f1p = _round_up(f1, _SUBLANE)   # 18 -> 24
    f2p = _round_up(f2, _SUBLANE)   # 20 -> 24
    w1_t = jnp.zeros((fi, f1p), jnp.float32).at[:, :f1].set(w1.T.astype(jnp.float32))
    w2_t = jnp.zeros((f1p, f2p), jnp.float32).at[:f1, :f2].set(w2.T.astype(jnp.float32))
    w3_t = jnp.zeros((f2p, fo), jnp.float32).at[:f2, :].set(w3.T.astype(jnp.float32))
    return w1_t, w2_t, w3_t


def simple_mlp_forward(x, w1_t, w2_t, w3_t, *, batch_tile=None):
    """Forward pass of SimpleMLP.

    x: (B, fi) float32; w*_t come from prepare_weights().
    Returns (B, fo) float32 matching relu(relu(x @ w1.T) @ w2.T) @ w3.T.
    """
    B, fi = x.shape
    f1p = w1_t.shape[1]
    f2p = w2_t.shape[1]
    fo = w3_t.shape[1]
    assert w1_t.shape == (fi, f1p) and w2_t.shape == (f1p, f2p) and w3_t.shape == (f2p, fo)

    # ---- VMEM accounting with (8,128) layout padding --------------------
    # Each f32 activation buffer costs ceil(width/128)*128*4 B per row
    # (512 B/row here, regardless of logical width 16/22/24).
    row_bytes = 4 * (
        2 * _round_up(fi, _LANE)       # x tile, double-buffered
        + 2 * _round_up(fo, _LANE)     # out tile, double-buffered
        + _round_up(f1p, _LANE)        # h1 intermediate
        + _round_up(f2p, _LANE))       # h2 intermediate
    weight_bytes = 4 * 2 * (           # weights, double-buffered (tiny)
        fi * _round_up(f1p, _LANE)
        + f1p * _round_up(f2p, _LANE)
        + f2p * _round_up(fo, _LANE))

    vmem_cap = _vmem_capacity_bytes()

    # ---- batch tile selection (only tiled axis) --------------------------
    if batch_tile is None:
        # Largest tile whose working set stays well inside VMEM (<=1/4 of
        # physical, <=16 MiB of activations), multiple of 256 for clean MXU
        # pass heights; ~4096 rows (~12 MiB) on all current chips.
        budget = min(vmem_cap // 4, 16 << 20) - weight_bytes
        batch_tile = max(256, (budget // row_bytes) // 256 * 256)
        batch_tile = min(batch_tile, 4096)
    tb = min(batch_tile, _round_up(B, _SUBLANE))
    tb = max(_round_up(tb, _SUBLANE), _SUBLANE)

    # Ragged final batch block is masked by Pallas (OOB input rows are padded,
    # OOB output rows are not written) -> no explicit batch-padding copy of x.
    grid = (pl.cdiv(B, tb),)

    vmem_bytes = tb * row_bytes + weight_bytes + (2 << 20)      # + headroom
    vmem_bytes = int(min(max(vmem_bytes, 4 << 20), vmem_cap // 2))

    # Advisory cost estimate: tiny FLOPs, memory/overhead-bound; bytes reflect
    # the real (unpadded) x read + output write + weights.
    cost = pl.CostEstimate(
        flops=2 * B * (fi * f1p + f1p * f2p + f2p * fo),
        transcendentals=0,
        bytes_accessed=4 * (B * (fi + fo) + fi * f1p + f1p * f2p + f2p * fo))

    return pl.pallas_call(
        _mlp_kernel,
        out_shape=jax.ShapeDtypeStruct((B, fo), jnp.float32),
        grid=grid,
        in_specs=[
            pl.BlockSpec((tb, fi), lambda i: (i, 0)),      # batch-tiled activations
            pl.BlockSpec((fi, f1p), lambda i: (0, 0)),     # weights stay VMEM-resident
            pl.BlockSpec((f1p, f2p), lambda i: (0, 0)),
            pl.BlockSpec((f2p, fo), lambda i: (0, 0)),
        ],
        # Output at its true width (fo == full array dim): no lane padding,
        # no post-kernel slice pass.
        out_specs=pl.BlockSpec((tb, fo), lambda i: (i, 0)),
        compiler_params=pltpu.CompilerParams(
            dimension_semantics=("parallel",),             # megacore-shardable batch axis
            vmem_limit_bytes=vmem_bytes,
        ),
        cost_estimate=cost,
    )(x, w1_t, w2_t, w3_t)


def _ref_forward(x, w1, w2, w3):
    h1 = jnp.maximum(x @ w1.T, 0.0)
    h2 = jnp.maximum(h1 @ w2.T, 0.0)
    return h2 @ w3.T


if __name__ == "__main__":
    fi, f1, f2, fo = 16, 18, 20, 22
    batch = 8

    key = jax.random.PRNGKey(0)
    kx, k1, k2, k3 = jax.random.split(key, 4)

    x = jax.random.normal(kx, (batch, fi), dtype=jnp.float32)

    # Deterministic params in PyTorch Linear layout (out_features, in_features).
    w1 = jax.random.uniform(k1, (f1, fi), jnp.float32, -1.0, 1.0) / jnp.sqrt(fi)
    w2 = jax.random.uniform(k2, (f2, f1), jnp.float32, -1.0, 1.0) / jnp.sqrt(f1)
    w3 = jax.random.uniform(k3, (fo, f2), jnp.float32, -1.0, 1.0) / jnp.sqrt(f2)

    # Hoisted once per weight set (perf feedback: keep pad/transpose off the
    # per-call hot path).
    w1_t, w2_t, w3_t = prepare_weights(w1, w2, w3)

    out = simple_mlp_forward(x, w1_t, w2_t, w3_t)
    out = jax.block_until_ready(out)

    ref = _ref_forward(x, w1, w2, w3)
    assert out.shape == (batch, fo), out.shape
    assert jnp.allclose(out, ref, atol=1e-5, rtol=1e-5), "mismatch vs reference"

    print("KERNEL_OK")
</pallas_src>

<mosaic_0001>
module attributes {stable_mosaic.version = 11 : i64} {
  func.func @_mlp_kernel(%arg0: i32, %arg1: memref<8x16xf32, #tpu.memory_space<vmem>>, %arg2: memref<16x24xf32, #tpu.memory_space<vmem>>, %arg3: memref<24x24xf32, #tpu.memory_space<vmem>>, %arg4: memref<24x22xf32, #tpu.memory_space<vmem>>, %arg5: memref<8x22xf32, #tpu.memory_space<vmem>>) attributes {dimension_semantics = [#tpu.dimension_semantics<parallel>], iteration_bounds = array<i64: 1>, scalar_prefetch = 0 : i64, scratch_operands = 0 : i64, tpu.core_type = #tpu.core_type<tc>, window_params = [{transform_indices = @transform_0, window_bounds = array<i64: 8, 16>}, {pipeline_mode = #tpu.pipeline_mode<synchronous>, transform_indices = @transform_1, window_bounds = array<i64: 16, 24>}, {pipeline_mode = #tpu.pipeline_mode<synchronous>, transform_indices = @transform_2, window_bounds = array<i64: 24, 24>}, {pipeline_mode = #tpu.pipeline_mode<synchronous>, transform_indices = @transform_3, window_bounds = array<i64: 24, 22>}, {transform_indices = @transform_4, window_bounds = array<i64: 8, 22>}]} {
    %c0 = arith.constant 0 : index
    %c0_0 = arith.constant 0 : index
    %0 = vector.load %arg1[%c0, %c0_0] : memref<8x16xf32, #tpu.memory_space<vmem>>, vector<8x16xf32>
    %c0_1 = arith.constant 0 : index
    %c0_2 = arith.constant 0 : index
    %1 = vector.load %arg2[%c0_1, %c0_2] : memref<16x24xf32, #tpu.memory_space<vmem>>, vector<16x24xf32>
    %cst = arith.constant dense<0.000000e+00> : vector<8x24xf32>
    %2 = tpu.matmul %0, %1, %cst {dimension_numbers = #tpu.dot_dimension_numbers<[1], [0], [0], [1], [0, 0, 1, 1], [], []>} : vector<8x16xf32>, vector<16x24xf32>, vector<8x24xf32> -> vector<8x24xf32>
    %cst_3 = arith.constant 0.000000e+00 : f32
    %3 = vector.broadcast %cst_3 : f32 to vector<8x24xf32>
    %4 = arith.maximumf %2, %3 : vector<8x24xf32>
    %c0_4 = arith.constant 0 : index
    %c0_5 = arith.constant 0 : index
    %5 = vector.load %arg3[%c0_4, %c0_5] : memref<24x24xf32, #tpu.memory_space<vmem>>, vector<24x24xf32>
    %cst_6 = arith.constant dense<0.000000e+00> : vector<8x24xf32>
    %6 = tpu.matmul %4, %5, %cst_6 {dimension_numbers = #tpu.dot_dimension_numbers<[1], [0], [0], [1], [0, 0, 1, 1], [], []>} : vector<8x24xf32>, vector<24x24xf32>, vector<8x24xf32> -> vector<8x24xf32>
    %cst_7 = arith.constant 0.000000e+00 : f32
    %7 = vector.broadcast %cst_7 : f32 to vector<8x24xf32>
    %8 = arith.maximumf %6, %7 : vector<8x24xf32>
    %c0_8 = arith.constant 0 : index
    %c0_9 = arith.constant 0 : index
    %9 = vector.load %arg4[%c0_8, %c0_9] : memref<24x22xf32, #tpu.memory_space<vmem>>, vector<24x22xf32>
    %cst_10 = arith.constant dense<0.000000e+00> : vector<8x22xf32>
    %10 = tpu.matmul %8, %9, %cst_10 {dimension_numbers = #tpu.dot_dimension_numbers<[1], [0], [0], [1], [0, 0, 1, 1], [], []>} : vector<8x24xf32>, vector<24x22xf32>, vector<8x22xf32> -> vector<8x22xf32>
    %c0_11 = arith.constant 0 : index
    %c0_12 = arith.constant 0 : index
    %11 = vector.load %arg5[%c0_11, %c0_12] : memref<8x22xf32, #tpu.memory_space<vmem>>, vector<8x22xf32>
    tpu.vector_store %arg5[%c0_11, %c0_12], %10 {strides = array<i32>} : memref<8x22xf32, #tpu.memory_space<vmem>>, vector<8x22xf32>,
    return
  }
  func.func @transform_0(%arg0: i32) -> (i32, i32) {
    %c0_i32 = arith.constant 0 : i32
    %c0_i32_0 = arith.constant 0 : i32
    return %arg0, %c0_i32 : i32, i32
  }
  func.func @transform_1(%arg0: i32) -> (i32, i32) {
    %c0_i32 = arith.constant 0 : i32
    %c0_i32_0 = arith.constant 0 : i32
    %c0_i32_1 = arith.constant 0 : i32
    return %c0_i32, %c0_i32_0 : i32, i32
  }
  func.func @transform_2(%arg0: i32) -> (i32, i32) {
    %c0_i32 = arith.constant 0 : i32
    %c0_i32_0 = arith.constant 0 : i32
    %c0_i32_1 = arith.constant 0 : i32
    return %c0_i32, %c0_i32_0 : i32, i32
  }
  func.func @transform_3(%arg0: i32) -> (i32, i32) {
    %c0_i32 = arith.constant 0 : i32
    %c0_i32_0 = arith.constant 0 : i32
    %c0_i32_1 = arith.constant 0 : i32
    return %c0_i32, %c0_i32_0 : i32, i32
  }
  func.func @transform_4(%arg0: i32) -> (i32, i32) {
    %c0_i32 = arith.constant 0 : i32
    %c0_i32_0 = arith.constant 0 : i32
    return %arg0, %c0_i32 : i32, i32
  }
}

</mosaic_0001>

<llo_original>
// kernel: tpu_custom_call.1
$region0: #{tpu_custom_call.1}
  #allocation0 [shape = 'u32[]', space=smem, size = 0x4, offset = 0x4, fixed_abs, tag = 'smem constant byte address 0x4 - core index']
  #allocation1 [shape = 'u32[144,128]{1,0:T(1,128)}', space=vmem, size = 0x12000, scoped, tag = 'internal scratch']
  %s0 = inlined_call_operand.hbm [shape: f32[8,16], index: 0, kind: input, shape index: {}]
  %s1 = inlined_call_operand.hbm [shape: f32[16,24], index: 1, kind: input, shape index: {}]
  %s2 = inlined_call_operand.hbm [shape: f32[24,24], index: 2, kind: input, shape index: {}]
  %s3 = inlined_call_operand.hbm [shape: f32[24,22], index: 3, kind: input, shape index: {}]
  %s4 = inlined_call_operand.hbm [shape: f32[8,22], index: 4, kind: output, shape index: {}]
  %s5 = sld [smem:[#allocation0]]
  $region42: #{tpu_custom_call.1} parent=0
    _
  %s7 = ssub.s32 1, %s5
  %s8 = scalar_select 0, %s7, %s5
  $region1: #{tpu_custom_call.1} parent=0
    #allocation2 [shape = 'u8[4096]{0}', space=vmem, size = 0x1000, scoped, tag = 'input window, operand 0, single buffered']
    #allocation3 [shape = 's32[1]{0}', space=sflag, size = 0x4, scoped, tag = 'scoped memory for tpu_custom_call.1']
    #allocation4 [shape = 's32[1]{0}', space=sflag, size = 0x4, scoped, tag = 'scoped memory for tpu_custom_call.1']
    #allocation5 [shape = 'u8[8192]{0}', space=vmem, size = 0x2000, scoped, tag = 'input window, operand 1, single buffered']
    #allocation6 [shape = 's32[1]{0}', space=sflag, size = 0x4, scoped, tag = 'scoped memory for tpu_custom_call.1']
    #allocation7 [shape = 'u8[12288]{0}', space=vmem, size = 0x3000, scoped, tag = 'input window, operand 2, single buffered']
    #allocation8 [shape = 'u8[12288]{0}', space=vmem, size = 0x3000, scoped, tag = 'input window, operand 3, single buffered']
    #allocation9 [shape = 's32[1]{0}', space=sflag, size = 0x4, scoped, tag = 'scoped memory for tpu_custom_call.1']
    #allocation10 [shape = 'u8[4096]{0}', space=vmem, size = 0x1000, scoped, tag = 'output window, operand 0, single buffered']
    %9 = vsyncpa [#allocation3], 0
    %10 = vsyncpa [#allocation6], 0
    %11 = vsyncpa [#allocation9], 0
    %12 = vsyncpa [#allocation4], 0
    // Predicated region
    $region2: #{tpu_custom_call.1} parent=1 // pred_check
      _
    $region3: #{tpu_custom_call.1} parent=1 // pred_check_branch
      %14 = sbr.rel (0) target = $region5
    $region4: #{tpu_custom_call.1} parent=1 // pred_region
      %s16 = ssub.s32 128, 128
      %17 = vsyncadd [#allocation3], %s16
      %s19 = sshll.u32 [#allocation2], 4
      %s20 = int_to_ptr.vmem [resolvable:$true] %s19
      %22 = dma.hbm_to_vmem [thread:$0]  %s0, 128, %s20, [#allocation3]
    $region5: #{tpu_custom_call.1} parent=1 // pred_fallthru
      _
    // Predicated region
    $region6: #{tpu_custom_call.1} parent=1 // pred_check
      _
    $region7: #{tpu_custom_call.1} parent=1 // pred_check_branch
      %24 = sbr.rel (0) target = $region9
    $region8: #{tpu_custom_call.1} parent=1 // pred_region
      %s26 = ssub.s32 256, 256
      %27 = vsyncadd [#allocation6], %s26
      %s28 = sshll.u32 [#allocation5], 4
      %s29 = int_to_ptr.vmem [resolvable:$true] %s28
      %34 = dma.hbm_to_vmem [thread:$0]  %s1, 256, %s29, [#allocation6], 128, 128, 8
    $region9: #{tpu_custom_call.1} parent=1 // pred_fallthru
      _
    // Predicated region
    $region10: #{tpu_custom_call.1} parent=1 // pred_check
      _
    $region11: #{tpu_custom_call.1} parent=1 // pred_check_branch
      %36 = sbr.rel (0) target = $region13
    $region12: #{tpu_custom_call.1} parent=1 // pred_region
      %s38 = ssub.s32 384, 384
      %39 = vsyncadd [#allocation6], %s38
      %s40 = sshll.u32 [#allocation7], 4
      %s41 = int_to_ptr.vmem [resolvable:$true] %s40
      %46 = dma.hbm_to_vmem [thread:$0]  %s2, 384, %s41, [#allocation6], 128, 128, 8
    $region13: #{tpu_custom_call.1} parent=1 // pred_fallthru
      _
    // Predicated region
    $region14: #{tpu_custom_call.1} parent=1 // pred_check
      _
    $region15: #{tpu_custom_call.1} parent=1 // pred_check_branch
      %48 = sbr.rel (0) target = $region17
    $region16: #{tpu_custom_call.1} parent=1 // pred_region
      %s50 = ssub.s32 384, 384
      %51 = vsyncadd [#allocation9], %s50
      %s52 = sshll.u32 [#allocation8], 4
      %s53 = int_to_ptr.vmem [resolvable:$true] %s52
      %58 = dma.hbm_to_vmem [thread:$0]  %s3, 384, %s53, [#allocation9], 128, 128, 8
    $region17: #{tpu_custom_call.1} parent=1 // pred_fallthru
      _
    // Predicated region
    $region18: #{tpu_custom_call.1} parent=1 // pred_check
      _
    $region19: #{tpu_custom_call.1} parent=1 // pred_check_branch
      %60 = sbr.rel (0) target = $region21
    $region20: #{tpu_custom_call.1} parent=1 // pred_region
      %61 = dma.done [#allocation3], 128
    $region21: #{tpu_custom_call.1} parent=1 // pred_fallthru
      _
    // Predicated region
    $region22: #{tpu_custom_call.1} parent=1 // pred_check
      _
    $region23: #{tpu_custom_call.1} parent=1 // pred_check_branch
      %63 = sbr.rel (0) target = $region25
    $region24: #{tpu_custom_call.1} parent=1 // pred_region
      %64 = dma.done [#allocation6], 256
    $region25: #{tpu_custom_call.1} parent=1 // pred_fallthru
      _
    // Predicated region
    $region26: #{tpu_custom_call.1} parent=1 // pred_check
      _
    $region27: #{tpu_custom_call.1} parent=1 // pred_check_branch
      %66 = sbr.rel (0) target = $region29
    $region28: #{tpu_custom_call.1} parent=1 // pred_region
      %67 = dma.done [#allocation6], 384
    $region29: #{tpu_custom_call.1} parent=1 // pred_fallthru
      _
    // Predicated region
    $region30: #{tpu_custom_call.1} parent=1 // pred_check
      _
    $region31: #{tpu_custom_call.1} parent=1 // pred_check_branch
      %69 = sbr.rel (0) target = $region33
    $region32: #{tpu_custom_call.1} parent=1 // pred_region
      %70 = dma.done [#allocation9], 384
    $region33: #{tpu_custom_call.1} parent=1 // pred_fallthru
      _
    %v71 = vld [vmem:[#allocation2] sm:$0xff]
    %v72 = vld [vmem:[#allocation5] sm:$0xff]
    %v73 = vld [vmem:[#allocation5 + $0x8] sm:$0xff]
    %vm74 = vcmask 130048
    %v76 = vsel %vm74, %v71, 0
    %78 = vmatprep.subr.mxu0 0.0
    %79 = vmatpush1.msra.mxu0 %v72
    %80 = vmatprep.subr.mxu0 0.0
    %81 = vmatpush1.msra.mxu0 %v73
    %82 = vmatprep.subr.mxu0 0.0
    %83 = vmatpush1.msra.mxu0 0.0
    %84 = vmatprep.subr.mxu0 0.0
    %85 = vmatpush1.msra.mxu0 0.0
    %86 = vmatprep.subr.mxu0 0.0
    %87 = vmatpush1.msra.mxu0 0.0
    %88 = vmatprep.subr.mxu0 0.0
    %89 = vmatpush1.msra.mxu0 0.0
    %90 = vmatprep.subr.mxu0 0.0
    %91 = vmatpush1.msra.mxu0 0.0
    %92 = vmatprep.subr.mxu0 0.0
    %93 = vmatpush1.msra.mxu0 0.0
    %94 = vmatprep.subr.mxu0 0.0
    %95 = vmatpush1.msra.mxu0 0.0
    %96 = vmatprep.subr.mxu0 0.0
    %97 = vmatpush1.msra.mxu0 0.0
    %98 = vmatprep.subr.mxu0 0.0
    %99 = vmatpush1.msra.mxu0 0.0
    %100 = vmatprep.subr.mxu0 0.0
    %101 = vmatpush1.msra.mxu0 0.0
    %102 = vmatprep.subr.mxu0 0.0
    %103 = vmatpush1.msra.mxu0 0.0
    %104 = vmatprep.subr.mxu0 0.0
    %105 = vmatpush1.msra.mxu0 0.0
    %106 = vmatprep.subr.mxu0 0.0
    %107 = vmatpush1.msra.mxu0 0.0
    %108 = vmatprep.subr.mxu0 0.0
    %109 = vmatpush1.msra.mxu0 0.0
    %110 = vmatprep.subr.mxu0 0.0
    %111 = vmatpush1.msra.mxu0 0.0
    %112 = vmatprep.subr.mxu0 0.0
    %113 = vmatpush1.msra.mxu0 0.0
    %114 = vmatprep.subr.mxu0 0.0
    %115 = vmatpush1.msra.mxu0 0.0
    %116 = vmatprep.subr.mxu0 0.0
    %117 = vmatpush1.msra.mxu0 0.0
    %118 = vmatprep.subr.mxu0 0.0
    %119 = vmatpush1.msra.mxu0 0.0
    %120 = vmatprep.subr.mxu0 0.0
    %121 = vmatpush1.msra.mxu0 0.0
    %122 = vmatprep.subr.mxu0 0.0
    %123 = vmatpush1.msra.mxu0 0.0
    %124 = vmatprep.subr.mxu0 0.0
    %125 = vmatpush1.msra.mxu0 0.0
    %126 = vmatprep.subr.mxu0 0.0
    %127 = vmatpush1.msra.mxu0 0.0
    %128 = vmatprep.subr.mxu0 0.0
    %129 = vmatpush1.msra.mxu0 0.0
    %130 = vmatprep.subr.mxu0 0.0
    %131 = vmatpush1.msra.mxu0 0.0
    %132 = vmatprep.subr.mxu0 0.0
    %133 = vmatpush1.msra.mxu0 0.0
    %134 = vmatprep.subr.mxu0 0.0
    %135 = vmatpush1.msra.mxu0 0.0
    %136 = vmatprep.subr.mxu0 0.0
    %137 = vmatpush1.msra.mxu0 0.0
    %138 = vmatprep.subr.mxu0 0.0
    %139 = vmatpush1.msra.mxu0 0.0
    %140 = vmatprep.subr.mxu0 0.0
    %141 = vmatpush1.msra.mxu0 0.0
    %142 = vmatprep.mubr.f32.mxu0 0.0
    %143 = vmatmul.mubr.f32.gmra.mrb[0].mxu0 %v76
    %v144 = vpop.f32.mrb[0].mxu0
    %v145 = vadd.f32 0.0, %v144
    %v146 = vpop.f32.mrb[0].mxu0
    %147 = vdwg.mxu0
    %v148 = vmax.f32 %v145, 0.0
    %v149 = vld [vmem:[#allocation7] sm:$0xff]
    %v150 = vld [vmem:[#allocation7 + $0x8] sm:$0xff]
    %v151 = vld [vmem:[#allocation7 + $0x10] sm:$0xff]
    %vm152 = vcmask 195584
    %v154 = vsel %vm152, %v148, 0
    %156 = vmatprep.subr.mxu0 0.0
    %157 = vmatpush1.msra.mxu0 %v149
    %158 = vmatprep.subr.mxu0 0.0
    %159 = vmatpush1.msra.mxu0 %v150
    %160 = vmatprep.subr.mxu0 0.0
    %161 = vmatpush1.msra.mxu0 %v151
    %162 = vmatprep.subr.mxu0 0.0
    %163 = vmatpush1.msra.mxu0 0.0
    %164 = vmatprep.subr.mxu0 0.0
    %165 = vmatpush1.msra.mxu0 0.0
    %166 = vmatprep.subr.mxu0 0.0
    %167 = vmatpush1.msra.mxu0 0.0
    %168 = vmatprep.subr.mxu0 0.0
    %169 = vmatpush1.msra.mxu0 0.0
    %170 = vmatprep.subr.mxu0 0.0
    %171 = vmatpush1.msra.mxu0 0.0
    %172 = vmatprep.subr.mxu0 0.0
    %173 = vmatpush1.msra.mxu0 0.0
    %174 = vmatprep.subr.mxu0 0.0
    %175 = vmatpush1.msra.mxu0 0.0
    %176 = vmatprep.subr.mxu0 0.0
    %177 = vmatpush1.msra.mxu0 0.0
    %178 = vmatprep.subr.mxu0 0.0
    %179 = vmatpush1.msra.mxu0 0.0
    %180 = vmatprep.subr.mxu0 0.0
    %181 = vmatpush1.msra.mxu0 0.0
    %182 = vmatprep.subr.mxu0 0.0
    %183 = vmatpush1.msra.mxu0 0.0
    %184 = vmatprep.subr.mxu0 0.0
    %185 = vmatpush1.msra.mxu0 0.0
    %186 = vmatprep.subr.mxu0 0.0
    %187 = vmatpush1.msra.mxu0 0.0
    %188 = vmatprep.subr.mxu0 0.0
    %189 = vmatpush1.msra.mxu0 0.0
    %190 = vmatprep.subr.mxu0 0.0
    %191 = vmatpush1.msra.mxu0 0.0
    %192 = vmatprep.subr.mxu0 0.0
    %193 = vmatpush1.msra.mxu0 0.0
    %194 = vmatprep.subr.mxu0 0.0
    %195 = vmatpush1.msra.mxu0 0.0
    %196 = vmatprep.subr.mxu0 0.0
    %197 = vmatpush1.msra.mxu0 0.0
    %198 = vmatprep.subr.mxu0 0.0
    %199 = vmatpush1.msra.mxu0 0.0
    %200 = vmatprep.subr.mxu0 0.0
    %201 = vmatpush1.msra.mxu0 0.0
    %202 = vmatprep.subr.mxu0 0.0
    %203 = vmatpush1.msra.mxu0 0.0
    %204 = vmatprep.subr.mxu0 0.0
    %205 = vmatpush1.msra.mxu0 0.0
    %206 = vmatprep.subr.mxu0 0.0
    %207 = vmatpush1.msra.mxu0 0.0
    %208 = vmatprep.subr.mxu0 0.0
    %209 = vmatpush1.msra.mxu0 0.0
    %210 = vmatprep.subr.mxu0 0.0
    %211 = vmatpush1.msra.mxu0 0.0
    %212 = vmatprep.subr.mxu0 0.0
    %213 = vmatpush1.msra.mxu0 0.0
    %214 = vmatprep.subr.mxu0 0.0
    %215 = vmatpush1.msra.mxu0 0.0
    %216 = vmatprep.subr.mxu0 0.0
    %217 = vmatpush1.msra.mxu0 0.0
    %218 = vmatprep.subr.mxu0 0.0
    %219 = vmatpush1.msra.mxu0 0.0
    %220 = vmatprep.mubr.f32.mxu0 0.0
    %221 = vmatmul.mubr.f32.gmra.mrb[0].mxu0 %v154
    %v222 = vpop.f32.mrb[0].mxu0
    %v223 = vadd.f32 0.0, %v222
    %v224 = vpop.f32.mrb[0].mxu0
    %225 = vdwg.mxu0
    %v226 = vmax.f32 %v223, 0.0
    %v227 = vld [vmem:[#allocation8] sm:$0xff]
    %v228 = vld [vmem:[#allocation8 + $0x8] sm:$0xff]
    %v229 = vld [vmem:[#allocation8 + $0x10] sm:$0xff]
    %v231 = vsel %vm152, %v226, 0
    %233 = vmatprep.subr.mxu0 0.0
    %234 = vmatpush1.msra.mxu0 %v227
    %235 = vmatprep.subr.mxu0 0.0
    %236 = vmatpush1.msra.mxu0 %v228
    %237 = vmatprep.subr.mxu0 0.0
    %238 = vmatpush1.msra.mxu0 %v229
    %239 = vmatprep.subr.mxu0 0.0
    %240 = vmatpush1.msra.mxu0 0.0
    %241 = vmatprep.subr.mxu0 0.0
    %242 = vmatpush1.msra.mxu0 0.0
    %243 = vmatprep.subr.mxu0 0.0
    %244 = vmatpush1.msra.mxu0 0.0
    %245 = vmatprep.subr.mxu0 0.0
    %246 = vmatpush1.msra.mxu0 0.0
    %247 = vmatprep.subr.mxu0 0.0
    %248 = vmatpush1.msra.mxu0 0.0
    %249 = vmatprep.subr.mxu0 0.0
    %250 = vmatpush1.msra.mxu0 0.0
    %251 = vmatprep.subr.mxu0 0.0
    %252 = vmatpush1.msra.mxu0 0.0
    %253 = vmatprep.subr.mxu0 0.0
    %254 = vmatpush1.msra.mxu0 0.0
    %255 = vmatprep.subr.mxu0 0.0
    %256 = vmatpush1.msra.mxu0 0.0
    %257 = vmatprep.subr.mxu0 0.0
    %258 = vmatpush1.msra.mxu0 0.0
    %259 = vmatprep.subr.mxu0 0.0
    %260 = vmatpush1.msra.mxu0 0.0
    %261 = vmatprep.subr.mxu0 0.0
    %262 = vmatpush1.msra.mxu0 0.0
    %263 = vmatprep.subr.mxu0 0.0
    %264 = vmatpush1.msra.mxu0 0.0
    %265 = vmatprep.subr.mxu0 0.0
    %266 = vmatpush1.msra.mxu0 0.0
    %267 = vmatprep.subr.mxu0 0.0
    %268 = vmatpush1.msra.mxu0 0.0
    %269 = vmatprep.subr.mxu0 0.0
    %270 = vmatpush1.msra.mxu0 0.0
    %271 = vmatprep.subr.mxu0 0.0
    %272 = vmatpush1.msra.mxu0 0.0
    %273 = vmatprep.subr.mxu0 0.0
    %274 = vmatpush1.msra.mxu0 0.0
    %275 = vmatprep.subr.mxu0 0.0
    %276 = vmatpush1.msra.mxu0 0.0
    %277 = vmatprep.subr.mxu0 0.0
    %278 = vmatpush1.msra.mxu0 0.0
    %279 = vmatprep.subr.mxu0 0.0
    %280 = vmatpush1.msra.mxu0 0.0
    %281 = vmatprep.subr.mxu0 0.0
    %282 = vmatpush1.msra.mxu0 0.0
    %283 = vmatprep.subr.mxu0 0.0
    %284 = vmatpush1.msra.mxu0 0.0
    %285 = vmatprep.subr.mxu0 0.0
    %286 = vmatpush1.msra.mxu0 0.0
    %287 = vmatprep.subr.mxu0 0.0
    %288 = vmatpush1.msra.mxu0 0.0
    %289 = vmatprep.subr.mxu0 0.0
    %290 = vmatpush1.msra.mxu0 0.0
    %291 = vmatprep.subr.mxu0 0.0
    %292 = vmatpush1.msra.mxu0 0.0
    %293 = vmatprep.subr.mxu0 0.0
    %294 = vmatpush1.msra.mxu0 0.0
    %295 = vmatprep.subr.mxu0 0.0
    %296 = vmatpush1.msra.mxu0 0.0
    %297 = vmatprep.mubr.f32.mxu0 0.0
    %298 = vmatmul.mubr.f32.gmra.mrb[0].mxu0 %v231
    %v299 = vpop.f32.mrb[0].mxu0
    %v300 = vadd.f32 0.0, %v299
    %v301 = vpop.f32.mrb[0].mxu0
    %302 = vdwg.mxu0
    %vm303 = vcmask 179200
    %304 = vst.msk [vmem:[#allocation10] sm:$0xff] %vm303, %v300
    // Predicated region
    $region34: #{tpu_custom_call.1} parent=1 // pred_check
      _
    $region35: #{tpu_custom_call.1} parent=1 // pred_check_branch
      %306 = sbr.rel (0) target = $region37
    $region36: #{tpu_custom_call.1} parent=1 // pred_region
      %s308 = ssub.s32 128, 128
      %309 = vsyncadd [#allocation4], %s308
      %s311 = sshll.u32 [#allocation10], 4
      %s312 = int_to_ptr.vmem [resolvable:$true] %s311
      %314 = dma.vmem_to_hbm [thread:$0]  %s312, 128, %s4, [#allocation4]
    $region37: #{tpu_custom_call.1} parent=1 // pred_fallthru
      _
    // Predicated region
    $region38: #{tpu_custom_call.1} parent=1 // pred_check
      _
    $region39: #{tpu_custom_call.1} parent=1 // pred_check_branch
      %316 = sbr.rel (0) target = $region41
    $region40: #{tpu_custom_call.1} parent=1 // pred_region
      %317 = dma.done [#allocation4], 128
    $region41: #{tpu_custom_call.1} parent=1 // pred_fallthru
      _
    %318 = vsyncpa [#allocation3], 1
    %319 = vsyncpa [#allocation6], 1
    %320 = vsyncpa [#allocation9], 1
    %321 = vsyncpa [#allocation4], 1

</llo_original>
